<compile_context>
chip_gen: v7x
topology: tpu7x:2x2x1
jax: 0.10.0
libtpu: 0.0.40
codegen_flags: <defaults>
</compile_context>

<pallas_src>
import functools

import jax
import jax.numpy as jnp
from jax.experimental import pallas as pl
from jax.experimental.pallas import tpu as pltpu

_LANE = 128      # lane width (last dim)
_SUBLANE = 8     # f32 sublane tile (second-to-last dim)


def _round_up(n: int, m: int) -> int:
    return ((n + m - 1) // m) * m


def _pick_batch_tile(bp: int, block_b: int) -> int:
    """Batch tile: aim for >=4 grid steps (megacore sharding + pipeline depth)
    but keep tiles >=128 rows so per-step DMA stays above the ~0.35us
    fixed grid-step overhead.  `bp` is already a multiple of 8."""
    tb = min(block_b, -(-bp // 4))   # ceil(bp / 4), capped at block_b
    tb = max(tb, 128)                # floor: one decent MXU/DMA pass per step
    tb = min(tb, bp)
    return _round_up(tb, _SUBLANE)


def _encoder_kernel(x_ref, a_ref, w1x_ref, w1a_ref, b1_ref, w2_ref, b2_ref,
                    out_ref, *, last_activation: bool):
    # x_ref:   (TB, obs)    batch-tiled observation rows (native dtype)
    # a_ref:   (TB, act)    batch-tiled action rows
    # w1x_ref: (obs, H1p)   W1[:obs]   (grid-invariant, VMEM-resident)
    # w1a_ref: (act, H1p)   W1[obs:]   (grid-invariant)
    # b1_ref:  (1, H1p)     f32
    # w2_ref:  (H1p, H2p)   grid-invariant
    # b2_ref:  (1, H2p)     f32
    # out_ref: (TB, H2p)    out_dtype (f32 or bf16)
    cdt = w1x_ref.dtype

    # Layer 1: split-K matmul (x | action) @ W1 with f32 MXU accumulation,
    # bias-add + ReLU on the f32 accumulator (VPU).
    h = jnp.dot(x_ref[...].astype(cdt), w1x_ref[...],
                preferred_element_type=jnp.float32)
    h = h + jnp.dot(a_ref[...].astype(cdt), w1a_ref[...],
                    preferred_element_type=jnp.float32)
    h = jnp.maximum(h + b1_ref[...], 0.0)

    # Layer 2 (cast intermediate to weight dtype so the bf16 path hits the
    # fast MXU mode; no-op for f32).
    y = jnp.dot(h.astype(cdt), w2_ref[...], preferred_element_type=jnp.float32)
    y = y + b2_ref[...]
    if last_activation:
        y = jnp.maximum(y, 0.0)
    out_ref[...] = y.astype(out_ref.dtype)


def vector_encoder_with_action(x, action, w1, b1, w2, b2, *,
                               block_b: int = 1024,
                               compute_dtype=jnp.float32,
                               out_dtype=None,
                               discrete_action: bool = False,
                               action_size: int | None = None,
                               last_activation: bool = True,
                               use_pallas: bool = True):
    """Forward pass of VectorEncoderWithAction (default 2-layer MLP config).

    x:      (B, obs) f32
    action: (B, act) f32  (or (B,)/(B,1) int if discrete_action=True)
    w1: (obs+act, h1), b1: (h1,) or (1, h1)
    w2: (h1, h2),      b2: (h2,) or (1, h2)
    """
    if discrete_action:
        # one-hot in the wrapper (free XLA plumbing), like F.one_hot(...).float()
        assert action_size is not None
        action = jax.nn.one_hot(action.reshape(-1).astype(jnp.int32),
                                action_size, dtype=x.dtype)

    B, obs = x.shape
    act = action.shape[1]
    H1 = w1.shape[1]
    H2 = w2.shape[1]
    assert w1.shape[0] == obs + act and w2.shape[0] == H1
    b1 = b1.reshape(1, H1)
    b2 = b2.reshape(1, H2)
    out_dtype = compute_dtype if out_dtype is None else out_dtype

    if not use_pallas:
        # Plain-XLA path for tiny shapes where a kernel launch is pure overhead.
        z = jnp.concatenate([x, action], axis=1).astype(compute_dtype)
        h = jnp.maximum(jnp.dot(z, w1.astype(compute_dtype),
                                preferred_element_type=jnp.float32) + b1, 0.0)
        y = jnp.dot(h.astype(compute_dtype), w2.astype(compute_dtype),
                    preferred_element_type=jnp.float32) + b2
        if last_activation:
            y = jnp.maximum(y, 0.0)
        return y.astype(out_dtype)

    # ---- lane-padded feature sizes (weights only; activations go in unpadded) ----
    H1p = _round_up(H1, _LANE)
    H2p = _round_up(H2, _LANE)

    # Split W1 at the concat boundary so the kernel never needs a padded z.
    w1x = jnp.pad(w1[:obs], ((0, 0), (0, H1p - H1))).astype(compute_dtype)
    w1a = jnp.pad(w1[obs:], ((0, 0), (0, H1p - H1))).astype(compute_dtype)
    w2p = jnp.pad(w2, ((0, H1p - H1), (0, H2p - H2))).astype(compute_dtype)
    # Biases stay f32 (added to the f32 accumulator).
    b1p = jnp.pad(b1, ((0, 0), (0, H1p - H1))).astype(jnp.float32)
    b2p = jnp.pad(b2, ((0, 0), (0, H2p - H2))).astype(jnp.float32)

    # Batch: pad only when B is not sublane-aligned (at most 7 rows).
    Bp = _round_up(B, _SUBLANE)
    if Bp != B:
        x = jnp.pad(x, ((0, Bp - B), (0, 0)))
        action = jnp.pad(action, ((0, Bp - B), (0, 0)))

    TB = _pick_batch_tile(Bp, block_b)
    grid = (pl.cdiv(Bp, TB),)

    csize = jnp.dtype(compute_dtype).itemsize
    cost = pl.CostEstimate(
        flops=2 * Bp * (obs + act) * H1p + 2 * Bp * H1p * H2p,
        transcendentals=0,
        bytes_accessed=(Bp * obs * x.dtype.itemsize          # x
                        + Bp * act * action.dtype.itemsize   # action
                        + (obs + act) * H1p * csize          # W1 (split)
                        + H1p * H2p * csize                  # W2
                        + (H1p + H2p) * 4                    # biases (f32)
                        + Bp * H2p * jnp.dtype(out_dtype).itemsize))  # output

    kernel = functools.partial(_encoder_kernel, last_activation=last_activation)

    out = pl.pallas_call(
        kernel,
        out_shape=jax.ShapeDtypeStruct((Bp, H2p), out_dtype),
        grid=grid,
        in_specs=[
            pl.BlockSpec((TB, obs), lambda i: (i, 0)),    # x, batch-tiled
            pl.BlockSpec((TB, act), lambda i: (i, 0)),    # action, batch-tiled
            pl.BlockSpec((obs, H1p), lambda i: (0, 0)),   # W1[:obs]  (resident)
            pl.BlockSpec((act, H1p), lambda i: (0, 0)),   # W1[obs:]  (resident)
            pl.BlockSpec((1, H1p), lambda i: (0, 0)),     # b1
            pl.BlockSpec((H1p, H2p), lambda i: (0, 0)),   # W2        (resident)
            pl.BlockSpec((1, H2p), lambda i: (0, 0)),     # b2
        ],
        out_specs=pl.BlockSpec((TB, H2p), lambda i: (i, 0)),
        compiler_params=pltpu.CompilerParams(
            dimension_semantics=("parallel",)),           # megacore on v7x
        cost_estimate=cost,
    )(x, action, w1x, w1a, b1p, w2p, b2p)

    # Undo padding only where it actually happened (no-op for aligned shapes).
    if Bp != B:
        out = out[:B]
    if H2p != H2:
        out = out[:, :H2]
    return out


def init_linear(key, in_units, out_units):
    # PyTorch nn.Linear default init: U(-1/sqrt(in), 1/sqrt(in)) for W and b.
    kw, kb = jax.random.split(key)
    bound = 1.0 / jnp.sqrt(jnp.float32(in_units))
    # stored as (in, out) so forward is x @ W  (== x @ torch_W.T)
    w = jax.random.uniform(kw, (in_units, out_units), jnp.float32, -bound, bound)
    b = jax.random.uniform(kb, (1, out_units), jnp.float32, -bound, bound)
    return w, b


if __name__ == "__main__":
    # Small shapes consistent with the module:
    #   observation_shape = (16,), action_size = 4, hidden_units = [32, 32]
    B, OBS, ACT = 8, 16, 4
    H1, H2 = 32, 32

    key = jax.random.PRNGKey(0)
    k_x, k_a, k_l1, k_l2, k_d = jax.random.split(key, 5)

    x = jax.random.normal(k_x, (B, OBS), jnp.float32)
    action = jax.random.normal(k_a, (B, ACT), jnp.float32)

    w1, b1 = init_linear(k_l1, OBS + ACT, H1)
    w2, b2 = init_linear(k_l2, H1, H2)

    # Pure-JAX reference (same math as the PyTorch module).
    def ref_fn(xx, aa):
        z = jnp.concatenate([xx, aa], axis=1)
        h = jnp.maximum(z @ w1 + b1, 0.0)
        return jnp.maximum(h @ w2 + b2, 0.0)

    ref = ref_fn(x, action)

    # f32 path (exact semantics).
    out = vector_encoder_with_action(x, action, w1, b1, w2, b2)
    out = jax.block_until_ready(out)
    assert out.shape == (B, H2)
    assert out.dtype == jnp.float32
    assert jnp.allclose(out, ref, atol=1e-5, rtol=1e-5)

    # bf16 compute + bf16 output fast path (valid on v5e/v6e/v7x: bf16 MXU with
    # f32 accumulation; halves activation/weight/output HBM bytes).
    out_bf16 = vector_encoder_with_action(
        x, action, w1, b1, w2, b2, compute_dtype=jnp.bfloat16)
    out_bf16 = jax.block_until_ready(out_bf16)
    assert out_bf16.dtype == jnp.bfloat16
    assert jnp.allclose(out_bf16.astype(jnp.float32), ref, atol=1e-1, rtol=1e-1)

    # discrete-action path (one-hot in the wrapper, same kernel shapes).
    action_ids = jax.random.randint(k_d, (B,), 0, ACT)
    ref_d = ref_fn(x, jax.nn.one_hot(action_ids, ACT, dtype=jnp.float32))
    out_d = vector_encoder_with_action(x, action_ids, w1, b1, w2, b2,
                                       discrete_action=True, action_size=ACT)
    out_d = jax.block_until_ready(out_d)
    assert jnp.allclose(out_d, ref_d, atol=1e-5, rtol=1e-5)

    print("KERNEL_OK")
</pallas_src>

<mosaic_0001>
module attributes {stable_mosaic.version = 11 : i64} {
  func.func @_encoder_kernel(%arg0: i32, %arg1: memref<8x16xf32, #tpu.memory_space<vmem>>, %arg2: memref<8x4xf32, #tpu.memory_space<vmem>>, %arg3: memref<16x128xf32, #tpu.memory_space<vmem>>, %arg4: memref<4x128xf32, #tpu.memory_space<vmem>>, %arg5: memref<1x128xf32, #tpu.memory_space<vmem>>, %arg6: memref<128x128xf32, #tpu.memory_space<vmem>>, %arg7: memref<1x128xf32, #tpu.memory_space<vmem>>, %arg8: memref<8x128xf32, #tpu.memory_space<vmem>>) attributes {dimension_semantics = [#tpu.dimension_semantics<parallel>], iteration_bounds = array<i64: 1>, scalar_prefetch = 0 : i64, scratch_operands = 0 : i64, tpu.core_type = #tpu.core_type<tc>, window_params = [{transform_indices = @transform_0, window_bounds = array<i64: 8, 16>}, {transform_indices = @transform_1, window_bounds = array<i64: 8, 4>}, {pipeline_mode = #tpu.pipeline_mode<synchronous>, transform_indices = @transform_2, window_bounds = array<i64: 16, 128>}, {pipeline_mode = #tpu.pipeline_mode<synchronous>, transform_indices = @transform_3, window_bounds = array<i64: 4, 128>}, {pipeline_mode = #tpu.pipeline_mode<synchronous>, transform_indices = @transform_4, window_bounds = array<i64: 1, 128>}, {pipeline_mode = #tpu.pipeline_mode<synchronous>, transform_indices = @transform_5, window_bounds = array<i64: 128, 128>}, {pipeline_mode = #tpu.pipeline_mode<synchronous>, transform_indices = @transform_6, window_bounds = array<i64: 1, 128>}, {transform_indices = @transform_7, window_bounds = array<i64: 8, 128>}]} {
    %c0 = arith.constant 0 : index
    %c0_0 = arith.constant 0 : index
    %0 = vector.load %arg1[%c0, %c0_0] : memref<8x16xf32, #tpu.memory_space<vmem>>, vector<8x16xf32>
    %c0_1 = arith.constant 0 : index
    %c0_2 = arith.constant 0 : index
    %1 = vector.load %arg3[%c0_1, %c0_2] : memref<16x128xf32, #tpu.memory_space<vmem>>, vector<16x128xf32>
    %cst = arith.constant dense<0.000000e+00> : vector<8x128xf32>
    %2 = tpu.matmul %0, %1, %cst {dimension_numbers = #tpu.dot_dimension_numbers<[1], [0], [0], [1], [0, 0, 1, 1], [], []>} : vector<8x16xf32>, vector<16x128xf32>, vector<8x128xf32> -> vector<8x128xf32>
    %c0_3 = arith.constant 0 : index
    %c0_4 = arith.constant 0 : index
    %3 = vector.load %arg2[%c0_3, %c0_4] : memref<8x4xf32, #tpu.memory_space<vmem>>, vector<8x4xf32>
    %c0_5 = arith.constant 0 : index
    %c0_6 = arith.constant 0 : index
    %4 = vector.load %arg4[%c0_5, %c0_6] : memref<4x128xf32, #tpu.memory_space<vmem>>, vector<4x128xf32>
    %cst_7 = arith.constant dense<0.000000e+00> : vector<8x128xf32>
    %5 = tpu.matmul %3, %4, %cst_7 {dimension_numbers = #tpu.dot_dimension_numbers<[1], [0], [0], [1], [0, 0, 1, 1], [], []>} : vector<8x4xf32>, vector<4x128xf32>, vector<8x128xf32> -> vector<8x128xf32>
    %6 = arith.addf %2, %5 : vector<8x128xf32>
    %c0_8 = arith.constant 0 : index
    %c0_9 = arith.constant 0 : index
    %7 = vector.load %arg5[%c0_8, %c0_9] : memref<1x128xf32, #tpu.memory_space<vmem>>, vector<1x128xf32>
    %8 = vector.broadcast %7 : vector<1x128xf32> to vector<8x128xf32>
    %9 = arith.addf %6, %8 : vector<8x128xf32>
    %cst_10 = arith.constant 0.000000e+00 : f32
    %10 = vector.broadcast %cst_10 : f32 to vector<8x128xf32>
    %11 = arith.maximumf %9, %10 : vector<8x128xf32>
    %c0_11 = arith.constant 0 : index
    %c0_12 = arith.constant 0 : index
    %12 = vector.load %arg6[%c0_11, %c0_12] : memref<128x128xf32, #tpu.memory_space<vmem>>, vector<128x128xf32>
    %cst_13 = arith.constant dense<0.000000e+00> : vector<8x128xf32>
    %13 = tpu.matmul %11, %12, %cst_13 {dimension_numbers = #tpu.dot_dimension_numbers<[1], [0], [0], [1], [0, 0, 1, 1], [], []>} : vector<8x128xf32>, vector<128x128xf32>, vector<8x128xf32> -> vector<8x128xf32>
    %c0_14 = arith.constant 0 : index
    %c0_15 = arith.constant 0 : index
    %14 = vector.load %arg7[%c0_14, %c0_15] : memref<1x128xf32, #tpu.memory_space<vmem>>, vector<1x128xf32>
    %15 = vector.broadcast %14 : vector<1x128xf32> to vector<8x128xf32>
    %16 = arith.addf %13, %15 : vector<8x128xf32>
    %cst_16 = arith.constant 0.000000e+00 : f32
    %17 = vector.broadcast %cst_16 : f32 to vector<8x128xf32>
    %18 = arith.maximumf %16, %17 : vector<8x128xf32>
    %c0_17 = arith.constant 0 : index
    %c0_18 = arith.constant 0 : index
    %19 = vector.load %arg8[%c0_17, %c0_18] : memref<8x128xf32, #tpu.memory_space<vmem>>, vector<8x128xf32>
    tpu.vector_store %arg8[%c0_17, %c0_18], %18 {strides = array<i32>} : memref<8x128xf32, #tpu.memory_space<vmem>>, vector<8x128xf32>,
    return
  }
  func.func @transform_0(%arg0: i32) -> (i32, i32) {
    %c0_i32 = arith.constant 0 : i32
    %c0_i32_0 = arith.constant 0 : i32
    return %arg0, %c0_i32 : i32, i32
  }
  func.func @transform_1(%arg0: i32) -> (i32, i32) {
    %c0_i32 = arith.constant 0 : i32
    %c0_i32_0 = arith.constant 0 : i32
    return %arg0, %c0_i32 : i32, i32
  }
  func.func @transform_2(%arg0: i32) -> (i32, i32) {
    %c0_i32 = arith.constant 0 : i32
    %c0_i32_0 = arith.constant 0 : i32
    %c0_i32_1 = arith.constant 0 : i32
    return %c0_i32, %c0_i32_0 : i32, i32
  }
  func.func @transform_3(%arg0: i32) -> (i32, i32) {
    %c0_i32 = arith.constant 0 : i32
    %c0_i32_0 = arith.constant 0 : i32
    %c0_i32_1 = arith.constant 0 : i32
    return %c0_i32, %c0_i32_0 : i32, i32
  }
  func.func @transform_4(%arg0: i32) -> (i32, i32) {
    %c0_i32 = arith.constant 0 : i32
    %c0_i32_0 = arith.constant 0 : i32
    %c0_i32_1 = arith.constant 0 : i32
    return %c0_i32, %c0_i32_0 : i32, i32
  }
  func.func @transform_5(%arg0: i32) -> (i32, i32) {
    %c0_i32 = arith.constant 0 : i32
    %c0_i32_0 = arith.constant 0 : i32
    %c0_i32_1 = arith.constant 0 : i32
    return %c0_i32, %c0_i32_0 : i32, i32
  }
  func.func @transform_6(%arg0: i32) -> (i32, i32) {
    %c0_i32 = arith.constant 0 : i32
    %c0_i32_0 = arith.constant 0 : i32
    %c0_i32_1 = arith.constant 0 : i32
    return %c0_i32, %c0_i32_0 : i32, i32
  }
  func.func @transform_7(%arg0: i32) -> (i32, i32) {
    %c0_i32 = arith.constant 0 : i32
    %c0_i32_0 = arith.constant 0 : i32
    return %arg0, %c0_i32 : i32, i32
  }
}

</mosaic_0001>

<llo_original>
// kernel: tpu_custom_call.1
$region0: #{tpu_custom_call.1}
  #allocation0 [shape = 'u32[]', space=smem, size = 0x4, offset = 0x4, fixed_abs, tag = 'smem constant byte address 0x4 - core index']
  #allocation1 [shape = 'u32[144,128]{1,0:T(1,128)}', space=vmem, size = 0x12000, scoped, tag = 'internal scratch']
  %s0 = inlined_call_operand.hbm [shape: f32[8,16], index: 0, kind: input, shape index: {}]
  %s1 = inlined_call_operand.vmem [shape: f32[8,4], index: 1, kind: input, shape index: {}]
  %s2 = inlined_call_operand.vmem [shape: f32[16,128], index: 2, kind: input, shape index: {}]
  %s3 = inlined_call_operand.vmem [shape: f32[4,128], index: 3, kind: input, shape index: {}]
  %s4 = inlined_call_operand.vmem [shape: f32[1,128], index: 4, kind: input, shape index: {}]
  %s5 = inlined_call_operand.hbm [shape: f32[128,128], index: 5, kind: input, shape index: {}]
  %s6 = inlined_call_operand.vmem [shape: f32[1,128], index: 6, kind: input, shape index: {}]
  %s7 = inlined_call_operand.hbm [shape: f32[8,128], index: 7, kind: output, shape index: {}]
  %s8 = sld [smem:[#allocation0]]
  $region46: #{tpu_custom_call.1} parent=0
    _
  %s10 = ssub.s32 1, %s8
  %s11 = scalar_select 0, %s10, %s8
  $region1: #{tpu_custom_call.1} parent=0
    #allocation2 [shape = 'u8[4096]{0}', space=vmem, size = 0x1000, scoped, tag = 'input window, operand 0, single buffered']
    #allocation3 [shape = 's32[1]{0}', space=sflag, size = 0x4, scoped, tag = 'scoped memory for tpu_custom_call.1']
    #allocation4 [shape = 's32[1]{0}', space=sflag, size = 0x4, scoped, tag = 'scoped memory for tpu_custom_call.1']
    #allocation5 [shape = 'u8[65536]{0}', space=vmem, size = 0x10000, scoped, tag = 'input window, operand 5, single buffered']
    #allocation6 [shape = 's32[1]{0}', space=sflag, size = 0x4, scoped, tag = 'scoped memory for tpu_custom_call.1']
    #allocation7 [shape = 'u8[4096]{0}', space=vmem, size = 0x1000, scoped, tag = 'output window, operand 0, single buffered']
    %12 = vsyncpa [#allocation3], 0
    %13 = vsyncpa [#allocation6], 0
    %14 = vsyncpa [#allocation4], 0
    // Predicated region
    $region2: #{tpu_custom_call.1} parent=1 // pred_check
      _
    $region3: #{tpu_custom_call.1} parent=1 // pred_check_branch
      %16 = sbr.rel (0) target = $region5
    $region4: #{tpu_custom_call.1} parent=1 // pred_region
      %s18 = ssub.s32 128, 128
      %19 = vsyncadd [#allocation3], %s18
      %s21 = sshll.u32 [#allocation2], 4
      %s22 = int_to_ptr.vmem [resolvable:$true] %s21
      %24 = dma.hbm_to_vmem [thread:$0]  %s0, 128, %s22, [#allocation3]
    $region5: #{tpu_custom_call.1} parent=1 // pred_fallthru
      _
    // Predicated region
    $region6: #{tpu_custom_call.1} parent=1 // pred_check
      _
    $region7: #{tpu_custom_call.1} parent=1 // pred_check_branch
      %26 = sbr.rel (0) target = $region9
    $region8: #{tpu_custom_call.1} parent=1 // pred_region
      _
    $region9: #{tpu_custom_call.1} parent=1 // pred_fallthru
      _
    // Predicated region
    $region10: #{tpu_custom_call.1} parent=1 // pred_check
      _
    $region11: #{tpu_custom_call.1} parent=1 // pred_check_branch
      %28 = sbr.rel (0) target = $region13
    $region12: #{tpu_custom_call.1} parent=1 // pred_region
      _
    $region13: #{tpu_custom_call.1} parent=1 // pred_fallthru
      _
    // Predicated region
    $region14: #{tpu_custom_call.1} parent=1 // pred_check
      _
    $region15: #{tpu_custom_call.1} parent=1 // pred_check_branch
      %30 = sbr.rel (0) target = $region17
    $region16: #{tpu_custom_call.1} parent=1 // pred_region
      _
    $region17: #{tpu_custom_call.1} parent=1 // pred_fallthru
      _
    // Predicated region
    $region18: #{tpu_custom_call.1} parent=1 // pred_check
      _
    $region19: #{tpu_custom_call.1} parent=1 // pred_check_branch
      %32 = sbr.rel (0) target = $region21
    $region20: #{tpu_custom_call.1} parent=1 // pred_region
      _
    $region21: #{tpu_custom_call.1} parent=1 // pred_fallthru
      _
    // Predicated region
    $region22: #{tpu_custom_call.1} parent=1 // pred_check
      _
    $region23: #{tpu_custom_call.1} parent=1 // pred_check_branch
      %34 = sbr.rel (0) target = $region25
    $region24: #{tpu_custom_call.1} parent=1 // pred_region
      %s36 = ssub.s32 2048, 2048
      %37 = vsyncadd [#allocation6], %s36
      %s38 = sshll.u32 [#allocation5], 4
      %s39 = int_to_ptr.vmem [resolvable:$true] %s38
      %44 = dma.hbm_to_vmem [thread:$0]  %s5, 2048, %s39, [#allocation6], 128, 128, 8
    $region25: #{tpu_custom_call.1} parent=1 // pred_fallthru
      _
    // Predicated region
    $region26: #{tpu_custom_call.1} parent=1 // pred_check
      _
    $region27: #{tpu_custom_call.1} parent=1 // pred_check_branch
      %46 = sbr.rel (0) target = $region29
    $region28: #{tpu_custom_call.1} parent=1 // pred_region
      _
    $region29: #{tpu_custom_call.1} parent=1 // pred_fallthru
      _
    // Predicated region
    $region30: #{tpu_custom_call.1} parent=1 // pred_check
      _
    $region31: #{tpu_custom_call.1} parent=1 // pred_check_branch
      %48 = sbr.rel (0) target = $region33
    $region32: #{tpu_custom_call.1} parent=1 // pred_region
      %49 = dma.done [#allocation3], 128
    $region33: #{tpu_custom_call.1} parent=1 // pred_fallthru
      _
    // Predicated region
    $region34: #{tpu_custom_call.1} parent=1 // pred_check
      _
    $region35: #{tpu_custom_call.1} parent=1 // pred_check_branch
      %51 = sbr.rel (0) target = $region37
    $region36: #{tpu_custom_call.1} parent=1 // pred_region
      %52 = dma.done [#allocation6], 2048
    $region37: #{tpu_custom_call.1} parent=1 // pred_fallthru
      _
    %v53 = vld [vmem:[#allocation2] sm:$0xff]
    %v54 = vld [vmem:[%s2] sm:$0xff]
    %v55 = vld [vmem:[%s2 + $0x8] sm:$0xff]
    %v56 = vld [vmem:[%s1] sm:$0xff]
    %v57 = vld [vmem:[%s3] sm:$0xf]
    %vm58 = vcmask 31744
    %v60 = vsel %vm58, %v56, 0
    %vm62 = vcmask 1043456
    %v64 = vsel %vm62, %v57, 0
    %66 = vmatprep.subr.mxu0 0.0
    %67 = vmatpush1.msra.mxu0 %v64
    %68 = vmatprep.subr.mxu0 0.0
    %69 = vmatpush1.msra.mxu0 0.0
    %70 = vmatprep.subr.mxu0 0.0
    %71 = vmatpush1.msra.mxu0 0.0
    %72 = vmatprep.subr.mxu0 0.0
    %73 = vmatpush1.msra.mxu0 0.0
    %74 = vmatprep.subr.mxu0 0.0
    %75 = vmatpush1.msra.mxu0 0.0
    %76 = vmatprep.subr.mxu0 0.0
    %77 = vmatpush1.msra.mxu0 0.0
    %78 = vmatprep.subr.mxu0 0.0
    %79 = vmatpush1.msra.mxu0 0.0
    %80 = vmatprep.subr.mxu0 0.0
    %81 = vmatpush1.msra.mxu0 0.0
    %82 = vmatprep.subr.mxu0 0.0
    %83 = vmatpush1.msra.mxu0 0.0
    %84 = vmatprep.subr.mxu0 0.0
    %85 = vmatpush1.msra.mxu0 0.0
    %86 = vmatprep.subr.mxu0 0.0
    %87 = vmatpush1.msra.mxu0 0.0
    %88 = vmatprep.subr.mxu0 0.0
    %89 = vmatpush1.msra.mxu0 0.0
    %90 = vmatprep.subr.mxu0 0.0
    %91 = vmatpush1.msra.mxu0 0.0
    %92 = vmatprep.subr.mxu0 0.0
    %93 = vmatpush1.msra.mxu0 0.0
    %94 = vmatprep.subr.mxu0 0.0
    %95 = vmatpush1.msra.mxu0 0.0
    %96 = vmatprep.subr.mxu0 0.0
    %97 = vmatpush1.msra.mxu0 0.0
    %98 = vmatprep.subr.mxu0 0.0
    %99 = vmatpush1.msra.mxu0 0.0
    %100 = vmatprep.subr.mxu0 0.0
    %101 = vmatpush1.msra.mxu0 0.0
    %102 = vmatprep.subr.mxu0 0.0
    %103 = vmatpush1.msra.mxu0 0.0
    %104 = vmatprep.subr.mxu0 0.0
    %105 = vmatpush1.msra.mxu0 0.0
    %106 = vmatprep.subr.mxu0 0.0
    %107 = vmatpush1.msra.mxu0 0.0
    %108 = vmatprep.subr.mxu0 0.0
    %109 = vmatpush1.msra.mxu0 0.0
    %110 = vmatprep.subr.mxu0 0.0
    %111 = vmatpush1.msra.mxu0 0.0
    %112 = vmatprep.subr.mxu0 0.0
    %113 = vmatpush1.msra.mxu0 0.0
    %114 = vmatprep.subr.mxu0 0.0
    %115 = vmatpush1.msra.mxu0 0.0
    %116 = vmatprep.subr.mxu0 0.0
    %117 = vmatpush1.msra.mxu0 0.0
    %118 = vmatprep.subr.mxu0 0.0
    %119 = vmatpush1.msra.mxu0 0.0
    %120 = vmatprep.subr.mxu0 0.0
    %121 = vmatpush1.msra.mxu0 0.0
    %122 = vmatprep.subr.mxu0 0.0
    %123 = vmatpush1.msra.mxu0 0.0
    %124 = vmatprep.subr.mxu0 0.0
    %125 = vmatpush1.msra.mxu0 0.0
    %126 = vmatprep.subr.mxu0 0.0
    %127 = vmatpush1.msra.mxu0 0.0
    %128 = vmatprep.subr.mxu0 0.0
    %129 = vmatpush1.msra.mxu0 0.0
    %130 = vmatprep.mubr.f32.mxu0 0.0
    %131 = vmatmul.mubr.f32.gmra.mrb[0].mxu0 %v60
    %v132 = vpop.f32.mrb[0].mxu0
    %v133 = vadd.f32 0.0, %v132
    %v134 = vpop.f32.mrb[0].mxu0
    %135 = vdwg.mxu0
    %vm136 = vcmask 130048
    %v138 = vsel %vm136, %v53, 0
    %140 = vmatprep.subr.mxu0 0.0
    %141 = vmatpush1.msra.mxu0 %v54
    %142 = vmatprep.subr.mxu0 0.0
    %143 = vmatpush1.msra.mxu0 %v55
    %144 = vmatprep.subr.mxu0 0.0
    %145 = vmatpush1.msra.mxu0 0.0
    %146 = vmatprep.subr.mxu0 0.0
    %147 = vmatpush1.msra.mxu0 0.0
    %148 = vmatprep.subr.mxu0 0.0
    %149 = vmatpush1.msra.mxu0 0.0
    %150 = vmatprep.subr.mxu0 0.0
    %151 = vmatpush1.msra.mxu0 0.0
    %152 = vmatprep.subr.mxu0 0.0
    %153 = vmatpush1.msra.mxu0 0.0
    %154 = vmatprep.subr.mxu0 0.0
    %155 = vmatpush1.msra.mxu0 0.0
    %156 = vmatprep.subr.mxu0 0.0
    %157 = vmatpush1.msra.mxu0 0.0
    %158 = vmatprep.subr.mxu0 0.0
    %159 = vmatpush1.msra.mxu0 0.0
    %160 = vmatprep.subr.mxu0 0.0
    %161 = vmatpush1.msra.mxu0 0.0
    %162 = vmatprep.subr.mxu0 0.0
    %163 = vmatpush1.msra.mxu0 0.0
    %164 = vmatprep.subr.mxu0 0.0
    %165 = vmatpush1.msra.mxu0 0.0
    %166 = vmatprep.subr.mxu0 0.0
    %167 = vmatpush1.msra.mxu0 0.0
    %168 = vmatprep.subr.mxu0 0.0
    %169 = vmatpush1.msra.mxu0 0.0
    %170 = vmatprep.subr.mxu0 0.0
    %171 = vmatpush1.msra.mxu0 0.0
    %172 = vmatprep.subr.mxu0 0.0
    %173 = vmatpush1.msra.mxu0 0.0
    %174 = vmatprep.subr.mxu0 0.0
    %175 = vmatpush1.msra.mxu0 0.0
    %176 = vmatprep.subr.mxu0 0.0
    %177 = vmatpush1.msra.mxu0 0.0
    %178 = vmatprep.subr.mxu0 0.0
    %179 = vmatpush1.msra.mxu0 0.0
    %180 = vmatprep.subr.mxu0 0.0
    %181 = vmatpush1.msra.mxu0 0.0
    %182 = vmatprep.subr.mxu0 0.0
    %183 = vmatpush1.msra.mxu0 0.0
    %184 = vmatprep.subr.mxu0 0.0
    %185 = vmatpush1.msra.mxu0 0.0
    %186 = vmatprep.subr.mxu0 0.0
    %187 = vmatpush1.msra.mxu0 0.0
    %188 = vmatprep.subr.mxu0 0.0
    %189 = vmatpush1.msra.mxu0 0.0
    %190 = vmatprep.subr.mxu0 0.0
    %191 = vmatpush1.msra.mxu0 0.0
    %192 = vmatprep.subr.mxu0 0.0
    %193 = vmatpush1.msra.mxu0 0.0
    %194 = vmatprep.subr.mxu0 0.0
    %195 = vmatpush1.msra.mxu0 0.0
    %196 = vmatprep.subr.mxu0 0.0
    %197 = vmatpush1.msra.mxu0 0.0
    %198 = vmatprep.subr.mxu0 0.0
    %199 = vmatpush1.msra.mxu0 0.0
    %200 = vmatprep.subr.mxu0 0.0
    %201 = vmatpush1.msra.mxu0 0.0
    %202 = vmatprep.subr.mxu0 0.0
    %203 = vmatpush1.msra.mxu0 0.0
    %204 = vmatprep.mubr.f32.mxu0 0.0
    %205 = vmatmul.mubr.f32.gmra.mrb[0].mxu0 %v138
    %v206 = vpop.f32.mrb[0].mxu0
    %v207 = vadd.f32 %v133, %v206
    %v208 = vpop.f32.mrb[0].mxu0
    %209 = vdwg.mxu0
    %v210 = vld [vmem:[%s4] sm:$0x1]
    %v212 = vlaneseq
    %v213 = vshrl.u32 %v212, 7
    %v214 = vsub.s32 0, %v213
    %v215 = vrot.slane %v210, %v214
    %v217 = vadd.f32 %v207, %v215
    %v218 = vmax.f32 %v217, 0.0
    %v219 = vld [vmem:[#allocation5] sm:$0xff]
    %v220 = vld [vmem:[#allocation5 + $0x8] sm:$0xff]
    %v221 = vld [vmem:[#allocation5 + $0x10] sm:$0xff]
    %v222 = vld [vmem:[#allocation5 + $0x18] sm:$0xff]
    %v223 = vld [vmem:[#allocation5 + $0x20] sm:$0xff]
    %v224 = vld [vmem:[#allocation5 + $0x28] sm:$0xff]
    %v225 = vld [vmem:[#allocation5 + $0x30] sm:$0xff]
    %v226 = vld [vmem:[#allocation5 + $0x38] sm:$0xff]
    %v227 = vld [vmem:[#allocation5 + $0x40] sm:$0xff]
    %v228 = vld [vmem:[#allocation5 + $0x48] sm:$0xff]
    %v229 = vld [vmem:[#allocation5 + $0x50] sm:$0xff]
    %v230 = vld [vmem:[#allocation5 + $0x58] sm:$0xff]
    %v231 = vld [vmem:[#allocation5 + $0x60] sm:$0xff]
    %v232 = vld [vmem:[#allocation5 + $0x68] sm:$0xff]
    %v233 = vld [vmem:[#allocation5 + $0x70] sm:$0xff]
    %v234 = vld [vmem:[#allocation5 + $0x78] sm:$0xff]
    %v235 = vld [vmem:[%s6] sm:$0x1]
    %v237 = vlaneseq
    %v238 = vshrl.u32 %v237, 7
    %v239 = vsub.s32 0, %v238
    %v240 = vrot.slane %v235, %v239
    %242 = vmatprep.subr.mxu0 0.0
    %243 = vmatpush1.msra.mxu0 %v219
    %244 = vmatprep.subr.mxu0 0.0
    %245 = vmatpush1.msra.mxu0 %v220
    %246 = vmatprep.subr.mxu0 0.0
    %247 = vmatpush1.msra.mxu0 %v221
    %248 = vmatprep.subr.mxu0 0.0
    %249 = vmatpush1.msra.mxu0 %v222
    %250 = vmatprep.subr.mxu0 0.0
    %251 = vmatpush1.msra.mxu0 %v223
    %252 = vmatprep.subr.mxu0 0.0
    %253 = vmatpush1.msra.mxu0 %v224
    %254 = vmatprep.subr.mxu0 0.0
    %255 = vmatpush1.msra.mxu0 %v225
    %256 = vmatprep.subr.mxu0 0.0
    %257 = vmatpush1.msra.mxu0 %v226
    %258 = vmatprep.subr.mxu0 0.0
    %259 = vmatpush1.msra.mxu0 %v227
    %260 = vmatprep.subr.mxu0 0.0
    %261 = vmatpush1.msra.mxu0 %v228
    %262 = vmatprep.subr.mxu0 0.0
    %263 = vmatpush1.msra.mxu0 %v229
    %264 = vmatprep.subr.mxu0 0.0
    %265 = vmatpush1.msra.mxu0 %v230
    %266 = vmatprep.subr.mxu0 0.0
    %267 = vmatpush1.msra.mxu0 %v231
    %268 = vmatprep.subr.mxu0 0.0
    %269 = vmatpush1.msra.mxu0 %v232
    %270 = vmatprep.subr.mxu0 0.0
    %271 = vmatpush1.msra.mxu0 %v233
    %272 = vmatprep.subr.mxu0 0.0
    %273 = vmatpush1.msra.mxu0 %v234
    %274 = vmatprep.subr.mxu0 0.0
    %275 = vmatpush1.msra.mxu0 0.0
    %276 = vmatprep.subr.mxu0 0.0
    %277 = vmatpush1.msra.mxu0 0.0
    %278 = vmatprep.subr.mxu0 0.0
    %279 = vmatpush1.msra.mxu0 0.0
    %280 = vmatprep.subr.mxu0 0.0
    %281 = vmatpush1.msra.mxu0 0.0
    %282 = vmatprep.subr.mxu0 0.0
    %283 = vmatpush1.msra.mxu0 0.0
    %284 = vmatprep.subr.mxu0 0.0
    %285 = vmatpush1.msra.mxu0 0.0
    %286 = vmatprep.subr.mxu0 0.0
    %287 = vmatpush1.msra.mxu0 0.0
    %288 = vmatprep.subr.mxu0 0.0
    %289 = vmatpush1.msra.mxu0 0.0
    %290 = vmatprep.subr.mxu0 0.0
    %291 = vmatpush1.msra.mxu0 0.0
    %292 = vmatprep.subr.mxu0 0.0
    %293 = vmatpush1.msra.mxu0 0.0
    %294 = vmatprep.subr.mxu0 0.0
    %295 = vmatpush1.msra.mxu0 0.0
    %296 = vmatprep.subr.mxu0 0.0
    %297 = vmatpush1.msra.mxu0 0.0
    %298 = vmatprep.subr.mxu0 0.0
    %299 = vmatpush1.msra.mxu0 0.0
    %300 = vmatprep.subr.mxu0 0.0
    %301 = vmatpush1.msra.mxu0 0.0
    %302 = vmatprep.subr.mxu0 0.0
    %303 = vmatpush1.msra.mxu0 0.0
    %304 = vmatprep.subr.mxu0 0.0
    %305 = vmatpush1.msra.mxu0 0.0
    %306 = vmatprep.mubr.f32.mxu0 0.0
    %307 = vmatmul.mubr.f32.gmra.mrb[0].mxu0 %v218
    %v308 = vpop.f32.mrb[0].mxu0
    %v309 = vadd.f32 %v240, %v308
    %v310 = vpop.f32.mrb[0].mxu0
    %311 = vdwg.mxu0
    %v312 = vmax.f32 %v309, 0.0
    %313 = vst [vmem:[#allocation7] sm:$0xff] %v312
    // Predicated region
    $region38: #{tpu_custom_call.1} parent=1 // pred_check
      _
    $region39: #{tpu_custom_call.1} parent=1 // pred_check_branch
      %315 = sbr.rel (0) target = $region41
    $region40: #{tpu_custom_call.1} parent=1 // pred_region
      %s317 = ssub.s32 128, 128
      %318 = vsyncadd [#allocation4], %s317
      %s320 = sshll.u32 [#allocation7], 4
      %s321 = int_to_ptr.vmem [resolvable:$true] %s320
      %323 = dma.vmem_to_hbm [thread:$0]  %s321, 128, %s7, [#allocation4]
    $region41: #{tpu_custom_call.1} parent=1 // pred_fallthru
      _
    // Predicated region
    $region42: #{tpu_custom_call.1} parent=1 // pred_check
      _
    $region43: #{tpu_custom_call.1} parent=1 // pred_check_branch
      %325 = sbr.rel (0) target = $region45
    $region44: #{tpu_custom_call.1} parent=1 // pred_region
      %326 = dma.done [#allocation4], 128
    $region45: #{tpu_custom_call.1} parent=1 // pred_fallthru
      _
    %327 = vsyncpa [#allocation3], 1
    %328 = vsyncpa [#allocation6], 1
    %329 = vsyncpa [#allocation4], 1

</llo_original>
